<compile_context>
chip_gen: v5e
topology: v5e:2x2
jax: 0.10.0
libtpu: 0.0.40
codegen_flags: <defaults>
</compile_context>

<pallas_src>
import functools

import jax
import jax.numpy as jnp
from jax.experimental import pallas as pl
from jax.experimental.pallas import tpu as pltpu

DROPOUT_P = 0.2


def _round_up(x, m):
    return (x + m - 1) // m * m


# ---------------------------------------------------------------------------
# Kernels
# ---------------------------------------------------------------------------
def _ffwd_resident_kernel(*refs, apply_mask):
    """Weights fully VMEM-resident: one fused pass per row tile, no scratch."""
    if apply_mask:
        x_ref, w1_ref, b1_ref, w2_ref, b2_ref, m_ref, o_ref = refs
    else:
        x_ref, w1_ref, b1_ref, w2_ref, b2_ref, o_ref = refs
        m_ref = None

    # Linear 1 (MXU) + bias + ReLU.
    h = jnp.dot(x_ref[...], w1_ref[...], preferred_element_type=jnp.float32)
    h = jnp.maximum(h + b1_ref[...], 0.0)
    # Linear 2 (MXU) + bias.
    y = jnp.dot(h.astype(w2_ref.dtype), w2_ref[...],
                preferred_element_type=jnp.float32)
    y = y + b2_ref[...]
    if apply_mask:
        y = y * m_ref[...].astype(jnp.float32)          # pre-scaled keep mask
    o_ref[...] = y.astype(o_ref.dtype)


def _ffwd_tiled_kernel(*refs, apply_mask):
    """Hidden dim tiled along grid axis 1 (reduction) with an f32 accumulator."""
    if apply_mask:
        x_ref, w1_ref, b1_ref, w2_ref, b2_ref, m_ref, o_ref, acc_ref = refs
    else:
        x_ref, w1_ref, b1_ref, w2_ref, b2_ref, o_ref, acc_ref = refs
        m_ref = None

    # NOTE: program_id / num_programs are read in the top-level body only
    # (never inside pl.when branches) so the kernel also lowers on interpret
    # backends — this was the bug in the previous version.
    hj = pl.program_id(1)
    n_h = pl.num_programs(1)

    @pl.when(hj == 0)
    def _():
        acc_ref[...] = jnp.zeros_like(acc_ref)

    # Linear 1 (MXU) + bias + ReLU for this hidden slab.  b1 is VMEM-resident,
    # reshaped to (n_hidden_tiles, th); pick this slab's row dynamically.
    h = jnp.dot(x_ref[...], w1_ref[...], preferred_element_type=jnp.float32)
    h = jnp.maximum(h + b1_ref[pl.ds(hj, 1), :], 0.0)

    # Linear 2 partial product, accumulated in f32 VMEM scratch.
    acc_ref[...] += jnp.dot(h.astype(w2_ref.dtype), w2_ref[...],
                            preferred_element_type=jnp.float32)

    @pl.when(hj == n_h - 1)
    def _():
        y = acc_ref[...] + b2_ref[...]
        if apply_mask:
            y = y * m_ref[...].astype(jnp.float32)
        o_ref[...] = y.astype(o_ref.dtype)


# ---------------------------------------------------------------------------
# Parameter preparation (pad + cast ONCE, reuse across calls)
# ---------------------------------------------------------------------------
def prepare_params(w1, b1, w2, b2, compute_dtype=jnp.bfloat16):
    """w1: (C, H), b1: (H,), w2: (H, C), b2: (C,).

    C and H are padded to multiples of 128 (lane-dense loads/stores).  Zero
    padding is exact: padded hidden units produce ReLU(0 + 0) = 0 and padded
    channels contribute nothing to real outputs.  Weights are cast to the
    compute dtype BEFORE padding so no full-size f32 copies are materialized.
    """
    C, H = w1.shape
    assert w2.shape == (H, C) and b1.shape == (H,) and b2.shape == (C,)
    C_pad, H_pad = _round_up(C, 128), _round_up(H, 128)

    w1c = w1.astype(compute_dtype)
    w2c = w2.astype(compute_dtype)
    if (C_pad, H_pad) != (C, H):
        w1c = jnp.pad(w1c, ((0, C_pad - C), (0, H_pad - H)))
        w2c = jnp.pad(w2c, ((0, H_pad - H), (0, C_pad - C)))
    b1p = b1.astype(jnp.float32).reshape(1, H)
    b2p = b2.astype(jnp.float32).reshape(1, C)
    if H_pad != H:
        b1p = jnp.pad(b1p, ((0, 0), (0, H_pad - H)))
    if C_pad != C:
        b2p = jnp.pad(b2p, ((0, 0), (0, C_pad - C)))
    return {"w1": w1c, "b1": b1p, "w2": w2c, "b2": b2p,
            "C": C, "H": H, "compute_dtype": compute_dtype}


# ---------------------------------------------------------------------------
# Forward wrapper
# ---------------------------------------------------------------------------
def feed_forward(x, params, *, training=False, rng_key=None, tm=None, th=None,
                 out_dtype=None, vmem_budget_bytes=40 * 1024 * 1024,
                 force_tiled=False):
    """x: (B, T, C) -> (B, T, C).  `params` is the output of prepare_params()."""
    w1, b1, w2, b2 = params["w1"], params["b1"], params["w2"], params["b2"]
    C, H, cdt = params["C"], params["H"], params["compute_dtype"]
    C_pad, H_pad = w1.shape
    B, T, Cx = x.shape
    assert Cx == C
    M = B * T
    out_dtype = x.dtype if out_dtype is None else out_dtype
    cbytes = jnp.dtype(cdt).itemsize
    obytes = jnp.dtype(out_dtype).itemsize

    # ---- tile selection ---------------------------------------------------
    def row_tile(req):
        t = min(_round_up(req, 8), _round_up(M, 8))
        m_pad = _round_up(M, t)
        # v7x has 2 TensorCores: give each core at least one row tile.
        if m_pad // t == 1 and t > 256:
            t = max(8, _round_up((t + 1) // 2, 8))
            m_pad = _round_up(M, t)
        return t, m_pad

    def vmem_est(tm_e, th_e, resident):
        b = 2 * tm_e * C_pad * cbytes            # x tile (double-buffered)
        b += 2 * tm_e * C_pad * obytes           # output tile
        if training:
            b += 2 * tm_e * C_pad * cbytes       # dropout mask tile
        b += 2 * 2 * C_pad * th_e * cbytes       # W1 + W2 slabs (double-buffered)
        b += 2 * 2 * (H_pad + C_pad) * 4         # biases (tiny)
        b += tm_e * th_e * 4                     # intermediate h (f32)
        if not resident:
            b += tm_e * C_pad * 4                # f32 accumulator scratch
        return b

    # Weight residency: DMA W1/W2 from HBM once per call and drop the
    # accumulator entirely whenever the whole hidden dim fits the VMEM budget.
    tm_nom, _ = row_tile(512 if tm is None else tm)
    resident = (not force_tiled) and (vmem_est(tm_nom, H_pad, True)
                                      <= vmem_budget_bytes)

    if tm is None:
        # When weights are re-streamed per row tile, arithmetic intensity vs.
        # that stream is ~tm flop/byte; v6e wants >= ~680, so default to 1024.
        tm = 512 if resident else 1024
    tm_eff, M_pad = row_tile(tm)

    # Hidden tile: a multiple of 128 that divides H_pad.
    n128 = H_pad // 128
    th_cands = [128 * d for d in range(1, n128 + 1) if n128 % d == 0]
    if resident:
        th_eff = H_pad
    else:
        if th is None:
            # Tiny row tiles (decode regime) cannot hide the weight DMA: use
            # bigger hidden slabs so there are fewer, larger transfers.
            th = 2048 if tm_eff <= 64 else 512
        th_eff = [t for t in th_cands if t <= max(th, 128)][-1]

    # Shrink tiles until the estimate fits the per-core budget
    # (v7x: 64 MiB/TC vs 128 MiB on v5e/v6e; default budget 40 MiB is safe).
    while vmem_est(tm_eff, th_eff, resident) > vmem_budget_bytes:
        smaller_th = [t for t in th_cands if t < th_eff]
        if (not resident) and smaller_th:
            th_eff = smaller_th[-1]
        elif tm_eff > 8:
            tm_eff = max(8, _round_up(tm_eff // 2, 8))
            M_pad = _round_up(M, tm_eff)
        else:
            break

    # ---- operand prep (cast first, pad only if needed) ----------------------
    x2 = x.reshape(M, C).astype(cdt)
    if (M_pad, C_pad) != (M, C):
        x2 = jnp.pad(x2, ((0, M_pad - M), (0, C_pad - C)))

    mask = None
    if training:
        if rng_key is None:
            rng_key = jax.random.PRNGKey(0)
        keep = jax.random.bernoulli(rng_key, 1.0 - DROPOUT_P, (M_pad, C_pad))
        # Pre-scaled inverted-dropout mask: values {0, 1/(1-p)}; 1.25 is exact
        # in bf16, so the kernel epilogue is a single multiply.
        mask = keep.astype(cdt) * jnp.asarray(1.0 / (1.0 - DROPOUT_P), cdt)

    n_rows = M_pad // tm_eff
    est = vmem_est(tm_eff, th_eff, resident)
    vmem_limit = int(min(max(est + est // 4 + (1 << 20), 32 << 20), 128 << 20))

    # Advisory cost on the real (unpadded) problem size.
    w_passes = 1 if resident else n_rows
    cost = pl.CostEstimate(
        flops=4 * M * C * H,
        transcendentals=0,
        bytes_accessed=int(M * C * (x.dtype.itemsize + obytes)
                           + w_passes * 2 * C * H * cbytes
                           + (M * C * cbytes if training else 0)
                           + 4 * (H + C)),
    )

    if resident:
        grid = (n_rows,)
        in_specs = [
            pl.BlockSpec((tm_eff, C_pad), lambda i: (i, 0)),     # x tile
            pl.BlockSpec((C_pad, H_pad), lambda i: (0, 0)),      # W1 (resident)
            pl.BlockSpec((1, H_pad), lambda i: (0, 0)),          # b1 (resident)
            pl.BlockSpec((H_pad, C_pad), lambda i: (0, 0)),      # W2 (resident)
            pl.BlockSpec((1, C_pad), lambda i: (0, 0)),          # b2 (resident)
        ]
        args = [x2, w1, b1, w2, b2]
        if training:
            in_specs.append(pl.BlockSpec((tm_eff, C_pad), lambda i: (i, 0)))
            args.append(mask)
        out_spec = pl.BlockSpec((tm_eff, C_pad), lambda i: (i, 0))
        kernel = functools.partial(_ffwd_resident_kernel, apply_mask=training)
        scratch = []
        dims = ("parallel",)
    else:
        n_h = H_pad // th_eff
        b1r = b1.reshape(n_h, th_eff)                            # tiny reshape
        grid = (n_rows, n_h)
        in_specs = [
            pl.BlockSpec((tm_eff, C_pad), lambda i, j: (i, 0)),  # x tile
            pl.BlockSpec((C_pad, th_eff), lambda i, j: (0, j)),  # W1 slab
            pl.BlockSpec((n_h, th_eff), lambda i, j: (0, 0)),    # b1 (resident)
            pl.BlockSpec((th_eff, C_pad), lambda i, j: (j, 0)),  # W2 slab
            pl.BlockSpec((1, C_pad), lambda i, j: (0, 0)),       # b2 (resident)
        ]
        args = [x2, w1, b1r, w2, b2]
        if training:
            in_specs.append(pl.BlockSpec((tm_eff, C_pad), lambda i, j: (i, 0)))
            args.append(mask)
        out_spec = pl.BlockSpec((tm_eff, C_pad), lambda i, j: (i, 0))
        kernel = functools.partial(_ffwd_tiled_kernel, apply_mask=training)
        scratch = [pltpu.VMEM((tm_eff, C_pad), jnp.float32)]
        dims = ("parallel", "arbitrary")

    out2d = pl.pallas_call(
        kernel,
        out_shape=jax.ShapeDtypeStruct((M_pad, C_pad), out_dtype),
        grid_spec=pltpu.PrefetchScalarGridSpec(
            num_scalar_prefetch=0,
            grid=grid,
            in_specs=in_specs,
            out_specs=out_spec,
            scratch_shapes=scratch,
        ),
        compiler_params=pltpu.CompilerParams(
            dimension_semantics=dims,
            vmem_limit_bytes=vmem_limit),
        cost_estimate=cost,
    )(*args)

    if (M_pad, C_pad) != (M, C):
        out2d = out2d[:M, :C]
    return out2d.reshape(B, T, C)


# ---------------------------------------------------------------------------
# Init (mirrors nn.Linear default init U(-1/sqrt(fan_in), +1/sqrt(fan_in)))
# ---------------------------------------------------------------------------
def init_params(key, n_embd):
    hidden = 4 * n_embd
    k1, k2, k3, k4 = jax.random.split(key, 4)
    lim1 = 1.0 / jnp.sqrt(jnp.float32(n_embd))
    lim2 = 1.0 / jnp.sqrt(jnp.float32(hidden))
    # stored (in_features, out_features) == PyTorch weight.T
    w1 = jax.random.uniform(k1, (n_embd, hidden), jnp.float32, -lim1, lim1)
    b1 = jax.random.uniform(k2, (hidden,), jnp.float32, -lim1, lim1)
    w2 = jax.random.uniform(k3, (hidden, n_embd), jnp.float32, -lim2, lim2)
    b2 = jax.random.uniform(k4, (n_embd,), jnp.float32, -lim2, lim2)
    return w1, b1, w2, b2


if __name__ == "__main__":
    key = jax.random.PRNGKey(0)
    kx, kp, kx2, kp2 = jax.random.split(key, 4)

    # --- small FeedForward: B=2, T=8, n_embd=32 (hidden = 4*32 = 128) -------
    B, T, n_embd = 2, 8, 32
    x = jax.random.normal(kx, (B, T, n_embd), dtype=jnp.float32)
    w1, b1, w2, b2 = init_params(kp, n_embd)
    ref = (jnp.maximum(x.reshape(-1, n_embd) @ w1 + b1, 0.0) @ w2 + b2
           ).reshape(B, T, n_embd)

    # 1) f32 compute path, eval mode (dropout identity), resident-weights path.
    p_f32 = prepare_params(w1, b1, w2, b2, compute_dtype=jnp.float32)
    out_f32 = feed_forward(x, p_f32, training=False)
    jax.block_until_ready(out_f32)
    assert jnp.allclose(out_f32, ref, atol=1e-4, rtol=1e-4), "f32 eval mismatch"

    # 2) default bf16 MXU path, eval mode: looser tolerance (bf16 operands).
    p_bf16 = prepare_params(w1, b1, w2, b2)
    out_bf16 = feed_forward(x, p_bf16, training=False)
    jax.block_until_ready(out_bf16)
    assert jnp.allclose(out_bf16, ref, atol=5e-2, rtol=5e-2), "bf16 eval mismatch"

    # 3) train mode: inverted dropout fused in the kernel epilogue.
    out_tr = feed_forward(x, p_bf16, training=True,
                          rng_key=jax.random.PRNGKey(123))
    jax.block_until_ready(out_tr)
    assert out_tr.shape == x.shape
    assert bool(jnp.all(jnp.isfinite(out_tr)))
    zfrac = float(jnp.mean(out_tr == 0.0))
    assert 0.05 <= zfrac <= 0.45, f"unexpected dropout zero-fraction {zfrac}"

    # 4) larger channels forced onto the hidden-tiled (streamed-weights) path.
    n2 = 256
    x2 = jax.random.normal(kx2, (B, T, n2), dtype=jnp.float32)
    w1b, b1b, w2b, b2b = init_params(kp2, n2)
    ref2 = (jnp.maximum(x2.reshape(-1, n2) @ w1b + b1b, 0.0) @ w2b + b2b
            ).reshape(B, T, n2)
    p2 = prepare_params(w1b, b1b, w2b, b2b, compute_dtype=jnp.float32)
    out_t = feed_forward(x2, p2, training=False, force_tiled=True, tm=8, th=256)
    jax.block_until_ready(out_t)
    assert jnp.allclose(out_t, ref2, atol=1e-4, rtol=1e-4), "tiled path mismatch"

    out_t_tr = feed_forward(x2, p2, training=True, force_tiled=True, tm=8,
                            th=256, rng_key=jax.random.PRNGKey(7))
    jax.block_until_ready(out_t_tr)
    assert out_t_tr.shape == x2.shape
    assert bool(jnp.all(jnp.isfinite(out_t_tr)))

    print("KERNEL_OK")
</pallas_src>

<mosaic_0001>
module attributes {stable_mosaic.version = 11 : i64} {
  func.func @_ffwd_resident_kernel(%arg0: i32, %arg1: memref<16x128xf32, #tpu.memory_space<vmem>>, %arg2: memref<128x128xf32, #tpu.memory_space<vmem>>, %arg3: memref<1x128xf32, #tpu.memory_space<vmem>>, %arg4: memref<128x128xf32, #tpu.memory_space<vmem>>, %arg5: memref<1x128xf32, #tpu.memory_space<vmem>>, %arg6: memref<16x128xf32, #tpu.memory_space<vmem>>) attributes {dimension_semantics = [#tpu.dimension_semantics<parallel>], iteration_bounds = array<i64: 1>, scalar_prefetch = 0 : i64, scratch_operands = 0 : i64, tpu.core_type = #tpu.core_type<tc>, window_params = [{transform_indices = @transform_0, window_bounds = array<i64: 16, 128>}, {pipeline_mode = #tpu.pipeline_mode<synchronous>, transform_indices = @transform_1, window_bounds = array<i64: 128, 128>}, {pipeline_mode = #tpu.pipeline_mode<synchronous>, transform_indices = @transform_2, window_bounds = array<i64: 1, 128>}, {pipeline_mode = #tpu.pipeline_mode<synchronous>, transform_indices = @transform_3, window_bounds = array<i64: 128, 128>}, {pipeline_mode = #tpu.pipeline_mode<synchronous>, transform_indices = @transform_4, window_bounds = array<i64: 1, 128>}, {transform_indices = @transform_5, window_bounds = array<i64: 16, 128>}]} {
    %c0 = arith.constant 0 : index
    %c0_0 = arith.constant 0 : index
    %0 = vector.load %arg1[%c0, %c0_0] : memref<16x128xf32, #tpu.memory_space<vmem>>, vector<16x128xf32>
    %c0_1 = arith.constant 0 : index
    %c0_2 = arith.constant 0 : index
    %1 = vector.load %arg2[%c0_1, %c0_2] : memref<128x128xf32, #tpu.memory_space<vmem>>, vector<128x128xf32>
    %cst = arith.constant dense<0.000000e+00> : vector<16x128xf32>
    %2 = tpu.matmul %0, %1, %cst {dimension_numbers = #tpu.dot_dimension_numbers<[1], [0], [0], [1], [0, 0, 1, 1], [], []>} : vector<16x128xf32>, vector<128x128xf32>, vector<16x128xf32> -> vector<16x128xf32>
    %c0_3 = arith.constant 0 : index
    %c0_4 = arith.constant 0 : index
    %3 = vector.load %arg3[%c0_3, %c0_4] : memref<1x128xf32, #tpu.memory_space<vmem>>, vector<1x128xf32>
    %4 = vector.broadcast %3 : vector<1x128xf32> to vector<16x128xf32>
    %5 = arith.addf %2, %4 : vector<16x128xf32>
    %cst_5 = arith.constant 0.000000e+00 : f32
    %6 = vector.broadcast %cst_5 : f32 to vector<16x128xf32>
    %7 = arith.maximumf %5, %6 : vector<16x128xf32>
    %c0_6 = arith.constant 0 : index
    %c0_7 = arith.constant 0 : index
    %8 = vector.load %arg4[%c0_6, %c0_7] : memref<128x128xf32, #tpu.memory_space<vmem>>, vector<128x128xf32>
    %cst_8 = arith.constant dense<0.000000e+00> : vector<16x128xf32>
    %9 = tpu.matmul %7, %8, %cst_8 {dimension_numbers = #tpu.dot_dimension_numbers<[1], [0], [0], [1], [0, 0, 1, 1], [], []>} : vector<16x128xf32>, vector<128x128xf32>, vector<16x128xf32> -> vector<16x128xf32>
    %c0_9 = arith.constant 0 : index
    %c0_10 = arith.constant 0 : index
    %10 = vector.load %arg5[%c0_9, %c0_10] : memref<1x128xf32, #tpu.memory_space<vmem>>, vector<1x128xf32>
    %11 = vector.broadcast %10 : vector<1x128xf32> to vector<16x128xf32>
    %12 = arith.addf %9, %11 : vector<16x128xf32>
    %c0_11 = arith.constant 0 : index
    %c0_12 = arith.constant 0 : index
    %13 = vector.load %arg6[%c0_11, %c0_12] : memref<16x128xf32, #tpu.memory_space<vmem>>, vector<16x128xf32>
    tpu.vector_store %arg6[%c0_11, %c0_12], %12 {strides = array<i32>} : memref<16x128xf32, #tpu.memory_space<vmem>>, vector<16x128xf32>,
    return
  }
  func.func @transform_0(%arg0: i32) -> (i32, i32) {
    %c0_i32 = arith.constant 0 : i32
    %c0_i32_0 = arith.constant 0 : i32
    return %arg0, %c0_i32 : i32, i32
  }
  func.func @transform_1(%arg0: i32) -> (i32, i32) {
    %c0_i32 = arith.constant 0 : i32
    %c0_i32_0 = arith.constant 0 : i32
    %c0_i32_1 = arith.constant 0 : i32
    return %c0_i32, %c0_i32_0 : i32, i32
  }
  func.func @transform_2(%arg0: i32) -> (i32, i32) {
    %c0_i32 = arith.constant 0 : i32
    %c0_i32_0 = arith.constant 0 : i32
    %c0_i32_1 = arith.constant 0 : i32
    return %c0_i32, %c0_i32_0 : i32, i32
  }
  func.func @transform_3(%arg0: i32) -> (i32, i32) {
    %c0_i32 = arith.constant 0 : i32
    %c0_i32_0 = arith.constant 0 : i32
    %c0_i32_1 = arith.constant 0 : i32
    return %c0_i32, %c0_i32_0 : i32, i32
  }
  func.func @transform_4(%arg0: i32) -> (i32, i32) {
    %c0_i32 = arith.constant 0 : i32
    %c0_i32_0 = arith.constant 0 : i32
    %c0_i32_1 = arith.constant 0 : i32
    return %c0_i32, %c0_i32_0 : i32, i32
  }
  func.func @transform_5(%arg0: i32) -> (i32, i32) {
    %c0_i32 = arith.constant 0 : i32
    %c0_i32_0 = arith.constant 0 : i32
    return %arg0, %c0_i32 : i32, i32
  }
}

</mosaic_0001>

<llo_original>
// kernel: tpu_custom_call.1
$region0: #{tpu_custom_call.1}
  #allocation0 [shape = 'u32[]', space=smem, size = 0x4, offset = 0x4, fixed_abs, tag = 'smem constant byte address 0x4 - core index']
  #allocation1 [shape = 'u32[72,128]{1,0:T(1,128)}', space=vmem, size = 0x9000, scoped, tag = 'internal scratch']
  %s0 = inlined_call_operand.hbm [shape: f32[16,128], index: 0, kind: input, shape index: {}]
  %s1 = inlined_call_operand.hbm [shape: f32[128,128], index: 1, kind: input, shape index: {}]
  %s2 = inlined_call_operand.vmem [shape: f32[1,128], index: 2, kind: input, shape index: {}]
  %s3 = inlined_call_operand.hbm [shape: f32[128,128], index: 3, kind: input, shape index: {}]
  %s4 = inlined_call_operand.vmem [shape: f32[1,128], index: 4, kind: input, shape index: {}]
  %s5 = inlined_call_operand.hbm [shape: f32[16,128], index: 5, kind: output, shape index: {}]
  %s6 = sld [smem:[#allocation0]]
  $region42: #{tpu_custom_call.1} parent=0
    _
  %s8 = ssub.s32 1, %s6
  %s9 = scalar_select 0, %s8, %s6
  $region1: #{tpu_custom_call.1} parent=0
    #allocation2 [shape = 'u8[8192]{0}', space=vmem, size = 0x2000, scoped, tag = 'input window, operand 0, single buffered']
    #allocation3 [shape = 's32[1]{0}', space=sflag, size = 0x4, scoped, tag = 'scoped memory for tpu_custom_call.1']
    #allocation4 [shape = 's32[1]{0}', space=sflag, size = 0x4, scoped, tag = 'scoped memory for tpu_custom_call.1']
    #allocation5 [shape = 'u8[65536]{0}', space=vmem, size = 0x10000, scoped, tag = 'input window, operand 1, single buffered']
    #allocation6 [shape = 's32[1]{0}', space=sflag, size = 0x4, scoped, tag = 'scoped memory for tpu_custom_call.1']
    #allocation7 [shape = 'u8[65536]{0}', space=vmem, size = 0x10000, scoped, tag = 'input window, operand 3, single buffered']
    #allocation8 [shape = 'u8[8192]{0}', space=vmem, size = 0x2000, scoped, tag = 'output window, operand 0, single buffered']
    %10 = vsyncpa [#allocation3], 0
    %11 = vsyncpa [#allocation6], 0
    %12 = vsyncpa [#allocation4], 0
    // Predicated region
    $region2: #{tpu_custom_call.1} parent=1 // pred_check
      _
    $region3: #{tpu_custom_call.1} parent=1 // pred_check_branch
      %14 = sbr.rel (0) target = $region5
    $region4: #{tpu_custom_call.1} parent=1 // pred_region
      %16 = vsyncadd [#allocation3], 0
      %s17 = sshll.u32 %s0, 4
      %s18 = int_to_ptr.hbm [resolvable:$true] %s17
      %s19 = sshll.u32 [#allocation2], 4
      %s20 = int_to_ptr.vmem [resolvable:$true] %s19
      %25 = dma.hbm_to_vmem [thread:$0]  %s18, 256, %s20, [#allocation3], 128, 128, 8
    $region5: #{tpu_custom_call.1} parent=1 // pred_fallthru
      _
    // Predicated region
    $region6: #{tpu_custom_call.1} parent=1 // pred_check
      _
    $region7: #{tpu_custom_call.1} parent=1 // pred_check_branch
      %27 = sbr.rel (0) target = $region9
    $region8: #{tpu_custom_call.1} parent=1 // pred_region
      %29 = vsyncadd [#allocation6], 0
      %s30 = sshll.u32 %s1, 4
      %s31 = int_to_ptr.hbm [resolvable:$true] %s30
      %s32 = sshll.u32 [#allocation5], 4
      %s33 = int_to_ptr.vmem [resolvable:$true] %s32
      %38 = dma.hbm_to_vmem [thread:$0]  %s31, 2048, %s33, [#allocation6], 128, 128, 8
    $region9: #{tpu_custom_call.1} parent=1 // pred_fallthru
      _
    // Predicated region
    $region10: #{tpu_custom_call.1} parent=1 // pred_check
      _
    $region11: #{tpu_custom_call.1} parent=1 // pred_check_branch
      %40 = sbr.rel (0) target = $region13
    $region12: #{tpu_custom_call.1} parent=1 // pred_region
      _
    $region13: #{tpu_custom_call.1} parent=1 // pred_fallthru
      _
    // Predicated region
    $region14: #{tpu_custom_call.1} parent=1 // pred_check
      _
    $region15: #{tpu_custom_call.1} parent=1 // pred_check_branch
      %42 = sbr.rel (0) target = $region17
    $region16: #{tpu_custom_call.1} parent=1 // pred_region
      %44 = vsyncadd [#allocation6], 0
      %s45 = sshll.u32 %s3, 4
      %s46 = int_to_ptr.hbm [resolvable:$true] %s45
      %s47 = sshll.u32 [#allocation7], 4
      %s48 = int_to_ptr.vmem [resolvable:$true] %s47
      %53 = dma.hbm_to_vmem [thread:$0]  %s46, 2048, %s48, [#allocation6], 128, 128, 8
    $region17: #{tpu_custom_call.1} parent=1 // pred_fallthru
      _
    // Predicated region
    $region18: #{tpu_custom_call.1} parent=1 // pred_check
      _
    $region19: #{tpu_custom_call.1} parent=1 // pred_check_branch
      %55 = sbr.rel (0) target = $region21
    $region20: #{tpu_custom_call.1} parent=1 // pred_region
      _
    $region21: #{tpu_custom_call.1} parent=1 // pred_fallthru
      _
    // Predicated region
    $region22: #{tpu_custom_call.1} parent=1 // pred_check
      _
    $region23: #{tpu_custom_call.1} parent=1 // pred_check_branch
      %57 = sbr.rel (0) target = $region25
    $region24: #{tpu_custom_call.1} parent=1 // pred_region
      %59 = dma.done [#allocation3], 256
    $region25: #{tpu_custom_call.1} parent=1 // pred_fallthru
      _
    // Predicated region
    $region26: #{tpu_custom_call.1} parent=1 // pred_check
      _
    $region27: #{tpu_custom_call.1} parent=1 // pred_check_branch
      %61 = sbr.rel (0) target = $region29
    $region28: #{tpu_custom_call.1} parent=1 // pred_region
      %63 = dma.done [#allocation6], 2048
    $region29: #{tpu_custom_call.1} parent=1 // pred_fallthru
      _
    // Predicated region
    $region30: #{tpu_custom_call.1} parent=1 // pred_check
      _
    $region31: #{tpu_custom_call.1} parent=1 // pred_check_branch
      %65 = sbr.rel (0) target = $region33
    $region32: #{tpu_custom_call.1} parent=1 // pred_region
      %67 = dma.done [#allocation6], 2048
    $region33: #{tpu_custom_call.1} parent=1 // pred_fallthru
      _
    %v68 = vld [vmem:[#allocation2] sm:$0xff]
    %v69 = vld [vmem:[#allocation2 + $0x8] sm:$0xff]
    %v70 = vld [vmem:[#allocation5] sm:$0xff]
    %v71 = vld [vmem:[#allocation5 + $0x8] sm:$0xff]
    %v72 = vld [vmem:[#allocation5 + $0x10] sm:$0xff]
    %v73 = vld [vmem:[#allocation5 + $0x18] sm:$0xff]
    %v74 = vld [vmem:[#allocation5 + $0x20] sm:$0xff]
    %v75 = vld [vmem:[#allocation5 + $0x28] sm:$0xff]
    %v76 = vld [vmem:[#allocation5 + $0x30] sm:$0xff]
    %v77 = vld [vmem:[#allocation5 + $0x38] sm:$0xff]
    %v78 = vld [vmem:[#allocation5 + $0x40] sm:$0xff]
    %v79 = vld [vmem:[#allocation5 + $0x48] sm:$0xff]
    %v80 = vld [vmem:[#allocation5 + $0x50] sm:$0xff]
    %v81 = vld [vmem:[#allocation5 + $0x58] sm:$0xff]
    %v82 = vld [vmem:[#allocation5 + $0x60] sm:$0xff]
    %v83 = vld [vmem:[#allocation5 + $0x68] sm:$0xff]
    %v84 = vld [vmem:[#allocation5 + $0x70] sm:$0xff]
    %v85 = vld [vmem:[#allocation5 + $0x78] sm:$0xff]
    %v86 = vld [vmem:[%s2] sm:$0x1]
    %v88 = vperm.slane %v86, 0
    %90 = vmatpush.msra.mxu0 %v85
    %91 = vmatpush.msra.mxu0 %v84
    %92 = vmatpush.msra.mxu0 %v83
    %93 = vmatpush.msra.mxu0 %v82
    %94 = vmatpush.msra.mxu0 %v81
    %95 = vmatpush.msra.mxu0 %v80
    %96 = vmatpush.msra.mxu0 %v79
    %97 = vmatpush.msra.mxu0 %v78
    %98 = vmatpush.msra.mxu0 %v77
    %99 = vmatpush.msra.mxu0 %v76
    %100 = vmatpush.msra.mxu0 %v75
    %101 = vmatpush.msra.mxu0 %v74
    %102 = vmatpush.msra.mxu0 %v73
    %103 = vmatpush.msra.mxu0 %v72
    %104 = vmatpush.msra.mxu0 %v71
    %105 = vmatpush.msra.mxu0 %v70
    %106 = vmatmul.f32.gmra.mxu0 %v68
    %v107 = vpop.f32.mrf.mxu0
    %v108 = vadd.f32 %v88, %v107
    %109 = vmatmul.f32.gmra.mxu0 %v69
    %v110 = vpop.f32.mrf.mxu0
    %v111 = vadd.f32 %v88, %v110
    %112 = vdwg.mxu0
    %v113 = vmax.f32 %v108, 0.0
    %v114 = vmax.f32 %v111, 0.0
    %v115 = vld [vmem:[#allocation7] sm:$0xff]
    %v116 = vld [vmem:[#allocation7 + $0x8] sm:$0xff]
    %v117 = vld [vmem:[#allocation7 + $0x10] sm:$0xff]
    %v118 = vld [vmem:[#allocation7 + $0x18] sm:$0xff]
    %v119 = vld [vmem:[#allocation7 + $0x20] sm:$0xff]
    %v120 = vld [vmem:[#allocation7 + $0x28] sm:$0xff]
    %v121 = vld [vmem:[#allocation7 + $0x30] sm:$0xff]
    %v122 = vld [vmem:[#allocation7 + $0x38] sm:$0xff]
    %v123 = vld [vmem:[#allocation7 + $0x40] sm:$0xff]
    %v124 = vld [vmem:[#allocation7 + $0x48] sm:$0xff]
    %v125 = vld [vmem:[#allocation7 + $0x50] sm:$0xff]
    %v126 = vld [vmem:[#allocation7 + $0x58] sm:$0xff]
    %v127 = vld [vmem:[#allocation7 + $0x60] sm:$0xff]
    %v128 = vld [vmem:[#allocation7 + $0x68] sm:$0xff]
    %v129 = vld [vmem:[#allocation7 + $0x70] sm:$0xff]
    %v130 = vld [vmem:[#allocation7 + $0x78] sm:$0xff]
    %v131 = vld [vmem:[%s4] sm:$0x1]
    %v133 = vperm.slane %v131, 0
    %135 = vmatpush.msra.mxu0 %v130
    %136 = vmatpush.msra.mxu0 %v129
    %137 = vmatpush.msra.mxu0 %v128
    %138 = vmatpush.msra.mxu0 %v127
    %139 = vmatpush.msra.mxu0 %v126
    %140 = vmatpush.msra.mxu0 %v125
    %141 = vmatpush.msra.mxu0 %v124
    %142 = vmatpush.msra.mxu0 %v123
    %143 = vmatpush.msra.mxu0 %v122
    %144 = vmatpush.msra.mxu0 %v121
    %145 = vmatpush.msra.mxu0 %v120
    %146 = vmatpush.msra.mxu0 %v119
    %147 = vmatpush.msra.mxu0 %v118
    %148 = vmatpush.msra.mxu0 %v117
    %149 = vmatpush.msra.mxu0 %v116
    %150 = vmatpush.msra.mxu0 %v115
    %151 = vmatmul.f32.gmra.mxu0 %v113
    %v152 = vpop.f32.mrf.mxu0
    %v153 = vadd.f32 %v133, %v152
    %154 = vmatmul.f32.gmra.mxu0 %v114
    %v155 = vpop.f32.mrf.mxu0
    %v156 = vadd.f32 %v133, %v155
    %157 = vdwg.mxu0
    %158 = vst [vmem:[#allocation8] sm:$0xff] %v153
    %159 = vst [vmem:[#allocation8 + $0x8] sm:$0xff] %v156
    // Predicated region
    $region34: #{tpu_custom_call.1} parent=1 // pred_check
      _
    $region35: #{tpu_custom_call.1} parent=1 // pred_check_branch
      %161 = sbr.rel (0) target = $region37
    $region36: #{tpu_custom_call.1} parent=1 // pred_region
      %163 = vsyncadd [#allocation4], 0
      %s164 = sshll.u32 [#allocation8], 4
      %s165 = int_to_ptr.vmem [resolvable:$true] %s164
      %s166 = sshll.u32 %s5, 4
      %s167 = int_to_ptr.hbm [resolvable:$true] %s166
      %172 = dma.vmem_to_hbm [thread:$0]  %s165, 256, %s167, [#allocation4], 128, 128, 8
    $region37: #{tpu_custom_call.1} parent=1 // pred_fallthru
      _
    // Predicated region
    $region38: #{tpu_custom_call.1} parent=1 // pred_check
      _
    $region39: #{tpu_custom_call.1} parent=1 // pred_check_branch
      %174 = sbr.rel (0) target = $region41
    $region40: #{tpu_custom_call.1} parent=1 // pred_region
      %176 = dma.done [#allocation4], 256
    $region41: #{tpu_custom_call.1} parent=1 // pred_fallthru
      _
    %177 = vsyncpa [#allocation3], 1
    %178 = vsyncpa [#allocation6], 1
    %179 = vsyncpa [#allocation4], 1

</llo_original>
